<compile_context>
chip_gen: v6e
topology: v6e:2x2x1
jax: 0.10.0
libtpu: 0.0.40
codegen_flags: <defaults>
</compile_context>

<pallas_src>
import jax
import jax.numpy as jnp
import numpy as np
from jax.experimental import pallas as pl
from jax.experimental.pallas import tpu as pltpu

# Six distinct 32-bit salts (pi hex digits) -> decorrelated Irwin-Hall draws.
_DRAW_SALTS = (0x243F6A88, 0x85A308D3, 0x13198A2E, 0x03707344,
               0xA4093822, 0x299F31D0)
_N_DRAWS = 6  # 6 x 32-bit hashes -> 12 x 16-bit uniforms (Irwin-Hall of 12)


def _hash_u32(x):
    """lowbias32-style integer hash; pure VPU ops (xor / shrui / mul)."""
    x = x ^ (x >> jnp.uint32(16))
    x = x * jnp.uint32(0x7FEB352D)
    x = x ^ (x >> jnp.uint32(15))
    x = x * jnp.uint32(0x846CA68B)
    x = x ^ (x >> jnp.uint32(16))
    return x


def _make_cutdeg_kernel(full_minor):
    """full_minor: padded flattened width W*C (static) for absolute indexing."""

    def kernel(params_ref, seed_ref, clean_ref, out_ref):
        """Grid = (row_tiles, col_tiles, N); k innermost so out stays resident.

        params_ref : SMEM int32 (5*N,) per-k: [cy, cy+ch, cx*C, (cx+cw)*C, sigma]
        seed_ref   : SMEM int32 (1,)   base PRNG seed
        clean_ref  : VMEM uint8 (TR, TC) clean background tile
        out_ref    : VMEM uint8 (TR, TC) augmented tile (resident across k)
        """
        r = pl.program_id(0)
        c = pl.program_id(1)
        k = pl.program_id(2)
        TR, TC = out_ref.shape

        # Background = clean image (is_clean_bkg=True -> no shuffle).
        @pl.when(k == 0)
        def _init():
            out_ref[...] = clean_ref[...]

        cy = params_ref[5 * k + 0]
        cy2 = params_ref[5 * k + 1]
        cxl = params_ref[5 * k + 2]
        cxr = params_ref[5 * k + 3]

        row0 = r * TR
        col0 = c * TC
        intersects = jnp.logical_and(
            jnp.logical_and(cy < row0 + TR, cy2 > row0),
            jnp.logical_and(cxl < col0 + TC, cxr > col0))

        # Skip noise generation + paste entirely when the cut rectangle misses
        # this (row, column) tile.
        @pl.when(intersects)
        def _paste():
            sigma = params_ref[5 * k + 4].astype(jnp.float32)

            # Absolute pixel coordinates for this tile.
            row = jax.lax.broadcasted_iota(jnp.int32, (TR, TC), 0) + row0
            col = jax.lax.broadcasted_iota(jnp.int32, (TR, TC), 1) + col0

            # ---- counter-based approx-Gaussian noise (Irwin-Hall of 12) ----
            idx = (row * full_minor + col).astype(jnp.uint32)
            h0 = _hash_u32(idx)  # shared across draws
            base = (seed_ref[0].astype(jnp.uint32) * jnp.uint32(0x9E3779B1)
                    + (jnp.asarray(k, jnp.int32) + 1).astype(jnp.uint32)
                    * jnp.uint32(0x85EBCA77))
            total = jnp.zeros((TR, TC), jnp.uint32)
            for d in range(_N_DRAWS):
                bits = _hash_u32(h0 ^ (base + jnp.uint32(_DRAW_SALTS[d])))
                # Two 16-bit uniforms per 32-bit word (halves the draw count).
                total = (total + (bits & jnp.uint32(0xFFFF))
                         + (bits >> jnp.uint32(16)))
            z = (total.astype(jnp.int32).astype(jnp.float32)
                 * jnp.float32(1.0 / 65536.0) - jnp.float32(6.0))

            # deg_func: additive Gaussian noise on the CLEAN image, clipped.
            clean_f = clean_ref[...].astype(jnp.int32).astype(jnp.float32)
            deg = jnp.clip(clean_f + sigma * z, 0.0, 255.0)
            deg_i = deg.astype(jnp.int32)  # truncation (matches np.uint8)

            # Rectangle mask: rows in [cy, cy2), flattened cols in [cxl, cxr).
            mask = (row >= cy) & (row < cy2) & (col >= cxl) & (col < cxr)

            merged = jnp.where(mask, deg_i, out_ref[...].astype(jnp.int32))
            out_ref[...] = merged.astype(jnp.uint8)

    return kernel


def _pick_col_tile(wcp, max_tile=512):
    """Largest multiple of 128 that divides wcp and is <= max_tile."""
    t = max_tile
    while t > 128 and wcp % t != 0:
        t -= 128
    return t


def cut_degradation_apply(clean_hwc, sigmas, cuts, seed, *,
                          row_tile=64, col_tile=512):
    """clean_hwc: (H, W, C) uint8 clean image.
       sigmas   : (N,) int   gaussian-noise degradation levels (deg_lev).
       cuts     : (N, 4) int [cut_y, cut_x, cut_h, cut_w].
       seed     : int, base seed for the in-kernel counter-based PRNG.
       Returns (H, W, C) uint8 augmented image."""
    H, W, C = clean_hwc.shape
    N = int(cuts.shape[0])
    WC = W * C

    # Lane-dense minor dim (multiple of 128); row tiling for large images.
    WCp = ((WC + 127) // 128) * 128
    TC = _pick_col_tile(WCp, col_tile)
    if H <= row_tile:
        TR, Hp = H, H
    else:
        TR = row_tile
        Hp = ((H + TR - 1) // TR) * TR

    clean2d = jnp.asarray(clean_hwc).reshape(H, WC).astype(jnp.uint8)
    if (Hp, WCp) != (H, WC):
        clean2d = jnp.pad(clean2d, ((0, Hp - H), (0, WCp - WC)))

    # Rectangle bounds precomputed in (row, flattened-column) units + sigma so
    # the kernel does no per-element division for the mask.  Flattened 1-D
    # layout avoids 2-D SMEM padding waste.
    cuts = jnp.asarray(cuts).astype(jnp.int32)
    cy, cx, ch, cw = cuts[:, 0], cuts[:, 1], cuts[:, 2], cuts[:, 3]
    params = jnp.stack(
        [cy, cy + ch, cx * C, (cx + cw) * C,
         jnp.asarray(sigmas).astype(jnp.int32)], axis=1).reshape(-1)
    seed_arr = jnp.asarray([seed], dtype=jnp.int32)

    kernel = _make_cutdeg_kernel(WCp)

    out = pl.pallas_call(
        kernel,
        out_shape=jax.ShapeDtypeStruct((Hp, WCp), jnp.uint8),
        grid_spec=pltpu.PrefetchScalarGridSpec(
            num_scalar_prefetch=2,                 # params + seed land in SMEM
            grid=(Hp // TR, WCp // TC, N),         # (row tiles, col tiles, k)
            in_specs=[
                pl.BlockSpec((TR, TC), lambda r, c, k, params, seed: (r, c)),
            ],
            out_specs=pl.BlockSpec((TR, TC), lambda r, c, k, params, seed: (r, c)),
        ),
        compiler_params=pltpu.CompilerParams(
            # Row/col tiles are independent (megacore-shardable); k revisits
            # the same output block -> that axis is "arbitrary" and innermost.
            dimension_semantics=("parallel", "parallel", "arbitrary")),
    )(params, seed_arr, clean2d)

    return out[:H, :WC].reshape(H, W, C)


if __name__ == "__main__":
    # Module config: deg_ranges=[(5,15),(5,15)], cut_ratios=(0.125, 0.75),
    # is_clean_bkg=True, is_clean_cutout=False, applied_prob=2.0
    H, W, C = 16, 16, 3
    N = 2
    cutratio_min, cutratio_max = 0.125, 0.75

    key = jax.random.PRNGKey(0)
    k_img, k_sig, k_rh, k_rw, k_cy, k_cx = jax.random.split(key, 6)

    clean = jax.random.randint(k_img, (H, W, C), 0, 256,
                               dtype=jnp.int32).astype(jnp.uint8)

    # deg_lev = random.randint(5, 15) per degraded image (noise sigma).
    sigmas = jax.random.randint(k_sig, (N,), 5, 16)

    # Cut rectangle geometry (host-side scalar randomness, mirrors random.*).
    rh = np.asarray(jax.random.uniform(k_rh, (N,), minval=cutratio_min,
                                       maxval=cutratio_max))
    rw = np.asarray(jax.random.uniform(k_rw, (N,), minval=cutratio_min,
                                       maxval=cutratio_max))
    u_y = np.asarray(jax.random.uniform(k_cy, (N,)))
    u_x = np.asarray(jax.random.uniform(k_cx, (N,)))
    cuts_np = np.zeros((N, 4), dtype=np.int32)
    for i in range(N):
        cut_h = int(H * rh[i])
        cut_w = int(W * rw[i])
        cut_y = int(u_y[i] * (H - cut_h + 1))   # random.randint(0, H - cut_h)
        cut_x = int(u_x[i] * (W - cut_w + 1))   # random.randint(0, W - cut_w)
        cuts_np[i] = (cut_y, cut_x, cut_h, cut_w)
    cuts = jnp.asarray(cuts_np)

    out = cut_degradation_apply(clean, sigmas, cuts, seed=1234)
    out = jax.block_until_ready(out)
    assert out.shape == (H, W, C) and out.dtype == jnp.uint8

    # --- structural checks (noise is generated in-kernel, so compare shape of
    #     the effect rather than exact values) ---
    clean_np = np.asarray(clean)
    out_np = np.asarray(out)
    rect_mask = np.zeros((H, W), dtype=bool)
    for i in range(N):
        cy_, cx_, ch_, cw_ = cuts_np[i]
        rect_mask[cy_:cy_ + ch_, cx_:cx_ + cw_] = True
    # Outside every cut rectangle, the augmented image is exactly the clean bkg.
    np.testing.assert_array_equal(out_np[~rect_mask], clean_np[~rect_mask])
    # Inside the cut rectangles, noise with sigma >= 5 must change most pixels.
    changed = (out_np[rect_mask].astype(np.int32)
               != clean_np[rect_mask].astype(np.int32))
    assert changed.mean() > 0.4, f"too few degraded pixels changed: {changed.mean()}"

    # Deterministic data-path check: sigma = 0 -> every degraded copy equals the
    # clean image, so the output must equal the input exactly (tests the u8->f32
    # cast chain, masking, paste order and f32->u8 truncation).
    out0 = jax.block_until_ready(
        cut_degradation_apply(clean, jnp.zeros((N,), jnp.int32), cuts, seed=1234))
    np.testing.assert_array_equal(np.asarray(out0), clean_np)

    print("KERNEL_OK")
</pallas_src>

<mosaic_0001>
module attributes {stable_mosaic.version = 11 : i64} {
  func.func @kernel(%arg0: i32, %arg1: i32, %arg2: i32, %arg3: memref<10xi32, #tpu.memory_space<smem>>, %arg4: memref<1xi32, #tpu.memory_space<smem>>, %arg5: memref<16x128xi8, #tpu.memory_space<vmem>>, %arg6: memref<16x128xi8, #tpu.memory_space<vmem>>) attributes {dimension_semantics = [#tpu.dimension_semantics<parallel>, #tpu.dimension_semantics<parallel>, #tpu.dimension_semantics<arbitrary>], iteration_bounds = array<i64: 1, 1, 2>, scalar_prefetch = 2 : i64, scratch_operands = 0 : i64, tpu.core_type = #tpu.core_type<tc>, window_params = [{transform_indices = @transform_0, window_bounds = array<i64: 16, 128>}, {transform_indices = @transform_1, window_bounds = array<i64: 16, 128>}]} {
    %c0_i32 = arith.constant 0 : i32
    %0 = arith.cmpi eq, %arg2, %c0_i32 : i32
    %1 = arith.extui %0 : i1 to i32
    %c0_i32_0 = arith.constant 0 : i32
    %2 = arith.cmpi ne, %1, %c0_i32_0 : i32
    scf.if %2 {
      %c0 = arith.constant 0 : index
      %c0_8 = arith.constant 0 : index
      %32 = vector.load %arg5[%c0, %c0_8] : memref<16x128xi8, #tpu.memory_space<vmem>>, vector<16x128xi8>
      %c0_9 = arith.constant 0 : index
      %c0_10 = arith.constant 0 : index
      %33 = vector.load %arg6[%c0_9, %c0_10] : memref<16x128xi8, #tpu.memory_space<vmem>>, vector<16x128xi8>
      tpu.vector_store %arg6[%c0_9, %c0_10], %32 {strides = array<i32>} : memref<16x128xi8, #tpu.memory_space<vmem>>, vector<16x128xi8>,
    } else {
    }
    %c5_i32 = arith.constant 5 : i32
    %3 = arith.muli %c5_i32, %arg2 : i32
    %c0_i32_1 = arith.constant 0 : i32
    %4 = arith.addi %3, %c0_i32_1 : i32
    %5 = arith.index_cast %4 : i32 to index
    %6 = memref.load %arg3[%5] : memref<10xi32, #tpu.memory_space<smem>>
    %c5_i32_2 = arith.constant 5 : i32
    %7 = arith.muli %c5_i32_2, %arg2 : i32
    %c1_i32 = arith.constant 1 : i32
    %8 = arith.addi %7, %c1_i32 : i32
    %9 = arith.index_cast %8 : i32 to index
    %10 = memref.load %arg3[%9] : memref<10xi32, #tpu.memory_space<smem>>
    %c5_i32_3 = arith.constant 5 : i32
    %11 = arith.muli %c5_i32_3, %arg2 : i32
    %c2_i32 = arith.constant 2 : i32
    %12 = arith.addi %11, %c2_i32 : i32
    %13 = arith.index_cast %12 : i32 to index
    %14 = memref.load %arg3[%13] : memref<10xi32, #tpu.memory_space<smem>>
    %c5_i32_4 = arith.constant 5 : i32
    %15 = arith.muli %c5_i32_4, %arg2 : i32
    %c3_i32 = arith.constant 3 : i32
    %16 = arith.addi %15, %c3_i32 : i32
    %17 = arith.index_cast %16 : i32 to index
    %18 = memref.load %arg3[%17] : memref<10xi32, #tpu.memory_space<smem>>
    %c16_i32 = arith.constant 16 : i32
    %19 = arith.muli %arg0, %c16_i32 : i32
    %c128_i32 = arith.constant 128 : i32
    %20 = arith.muli %arg1, %c128_i32 : i32
    %c16_i32_5 = arith.constant 16 : i32
    %21 = arith.addi %19, %c16_i32_5 : i32
    %22 = arith.cmpi slt, %6, %21 : i32
    %23 = arith.cmpi sgt, %10, %19 : i32
    %24 = arith.andi %22, %23 : i1
    %c128_i32_6 = arith.constant 128 : i32
    %25 = arith.addi %20, %c128_i32_6 : i32
    %26 = arith.cmpi slt, %14, %25 : i32
    %27 = arith.cmpi sgt, %18, %20 : i32
    %28 = arith.andi %26, %27 : i1
    %29 = arith.andi %24, %28 : i1
    %30 = arith.extui %29 : i1 to i32
    %c0_i32_7 = arith.constant 0 : i32
    %31 = arith.cmpi ne, %30, %c0_i32_7 : i32
    scf.if %31 {
      %c5_i32_8 = arith.constant 5 : i32
      %32 = arith.muli %c5_i32_8, %arg2 : i32
      %c4_i32 = arith.constant 4 : i32
      %33 = arith.addi %32, %c4_i32 : i32
      %34 = arith.index_cast %33 : i32 to index
      %35 = memref.load %arg3[%34] : memref<10xi32, #tpu.memory_space<smem>>
      %36 = arith.sitofp %35 : i32 to f32
      %37 = tpu.iota {dimensions = array<i32: 0>} : vector<16x128xi32>
      %38 = vector.broadcast %19 : i32 to vector<16x128xi32>
      %39 = arith.addi %37, %38 : vector<16x128xi32>
      %40 = tpu.iota {dimensions = array<i32: 1>} : vector<16x128xi32>
      %41 = vector.broadcast %20 : i32 to vector<16x128xi32>
      %42 = arith.addi %40, %41 : vector<16x128xi32>
      %c128_i32_9 = arith.constant 128 : i32
      %43 = vector.broadcast %c128_i32_9 : i32 to vector<16x128xi32>
      %44 = arith.muli %39, %43 : vector<16x128xi32>
      %45 = arith.addi %44, %42 : vector<16x128xi32>
      %c16_i32_10 = arith.constant 16 : i32
      %46 = vector.broadcast %c16_i32_10 : i32 to vector<16x128xi32>
      %47 = arith.shrui %45, %46 : vector<16x128xi32>
      %48 = arith.xori %45, %47 : vector<16x128xi32>
      %c2146121005_i32 = arith.constant 2146121005 : i32
      %49 = vector.broadcast %c2146121005_i32 : i32 to vector<16x128xi32>
      %50 = arith.muli %48, %49 : vector<16x128xi32>
      %c15_i32 = arith.constant 15 : i32
      %51 = vector.broadcast %c15_i32 : i32 to vector<16x128xi32>
      %52 = arith.shrui %50, %51 : vector<16x128xi32>
      %53 = arith.xori %50, %52 : vector<16x128xi32>
      %c-2073254261_i32 = arith.constant -2073254261 : i32
      %54 = vector.broadcast %c-2073254261_i32 : i32 to vector<16x128xi32>
      %55 = arith.muli %53, %54 : vector<16x128xi32>
      %c16_i32_11 = arith.constant 16 : i32
      %56 = vector.broadcast %c16_i32_11 : i32 to vector<16x128xi32>
      %57 = arith.shrui %55, %56 : vector<16x128xi32>
      %58 = arith.xori %55, %57 : vector<16x128xi32>
      %c0 = arith.constant 0 : index
      %59 = memref.load %arg4[%c0] : memref<1xi32, #tpu.memory_space<smem>>
      %c-1640531535_i32 = arith.constant -1640531535 : i32
      %60 = arith.muli %59, %c-1640531535_i32 : i32
      %c1_i32_12 = arith.constant 1 : i32
      %61 = arith.addi %arg2, %c1_i32_12 : i32
      %c-2048144777_i32 = arith.constant -2048144777 : i32
      %62 = arith.muli %61, %c-2048144777_i32 : i32
      %63 = arith.addi %60, %62 : i32
      %c0_i32_13 = arith.constant 0 : i32
      %64 = vector.broadcast %c0_i32_13 : i32 to vector<16x128xi32>
      %c608135816_i32 = arith.constant 608135816 : i32
      %65 = arith.addi %63, %c608135816_i32 : i32
      %66 = vector.broadcast %65 : i32 to vector<16x128xi32>
      %67 = arith.xori %58, %66 : vector<16x128xi32>
      %c16_i32_14 = arith.constant 16 : i32
      %68 = vector.broadcast %c16_i32_14 : i32 to vector<16x128xi32>
      %69 = arith.shrui %67, %68 : vector<16x128xi32>
      %70 = arith.xori %67, %69 : vector<16x128xi32>
      %c2146121005_i32_15 = arith.constant 2146121005 : i32
      %71 = vector.broadcast %c2146121005_i32_15 : i32 to vector<16x128xi32>
      %72 = arith.muli %70, %71 : vector<16x128xi32>
      %c15_i32_16 = arith.constant 15 : i32
      %73 = vector.broadcast %c15_i32_16 : i32 to vector<16x128xi32>
      %74 = arith.shrui %72, %73 : vector<16x128xi32>
      %75 = arith.xori %72, %74 : vector<16x128xi32>
      %c-2073254261_i32_17 = arith.constant -2073254261 : i32
      %76 = vector.broadcast %c-2073254261_i32_17 : i32 to vector<16x128xi32>
      %77 = arith.muli %75, %76 : vector<16x128xi32>
      %c16_i32_18 = arith.constant 16 : i32
      %78 = vector.broadcast %c16_i32_18 : i32 to vector<16x128xi32>
      %79 = arith.shrui %77, %78 : vector<16x128xi32>
      %80 = arith.xori %77, %79 : vector<16x128xi32>
      %c65535_i32 = arith.constant 65535 : i32
      %81 = vector.broadcast %c65535_i32 : i32 to vector<16x128xi32>
      %82 = arith.andi %80, %81 : vector<16x128xi32>
      %83 = arith.addi %64, %82 : vector<16x128xi32>
      %c16_i32_19 = arith.constant 16 : i32
      %84 = vector.broadcast %c16_i32_19 : i32 to vector<16x128xi32>
      %85 = arith.shrui %80, %84 : vector<16x128xi32>
      %86 = arith.addi %83, %85 : vector<16x128xi32>
      %c-2052912941_i32 = arith.constant -2052912941 : i32
      %87 = arith.addi %63, %c-2052912941_i32 : i32
      %88 = vector.broadcast %87 : i32 to vector<16x128xi32>
      %89 = arith.xori %58, %88 : vector<16x128xi32>
      %c16_i32_20 = arith.constant 16 : i32
      %90 = vector.broadcast %c16_i32_20 : i32 to vector<16x128xi32>
      %91 = arith.shrui %89, %90 : vector<16x128xi32>
      %92 = arith.xori %89, %91 : vector<16x128xi32>
      %c2146121005_i32_21 = arith.constant 2146121005 : i32
      %93 = vector.broadcast %c2146121005_i32_21 : i32 to vector<16x128xi32>
      %94 = arith.muli %92, %93 : vector<16x128xi32>
      %c15_i32_22 = arith.constant 15 : i32
      %95 = vector.broadcast %c15_i32_22 : i32 to vector<16x128xi32>
      %96 = arith.shrui %94, %95 : vector<16x128xi32>
      %97 = arith.xori %94, %96 : vector<16x128xi32>
      %c-2073254261_i32_23 = arith.constant -2073254261 : i32
      %98 = vector.broadcast %c-2073254261_i32_23 : i32 to vector<16x128xi32>
      %99 = arith.muli %97, %98 : vector<16x128xi32>
      %c16_i32_24 = arith.constant 16 : i32
      %100 = vector.broadcast %c16_i32_24 : i32 to vector<16x128xi32>
      %101 = arith.shrui %99, %100 : vector<16x128xi32>
      %102 = arith.xori %99, %101 : vector<16x128xi32>
      %c65535_i32_25 = arith.constant 65535 : i32
      %103 = vector.broadcast %c65535_i32_25 : i32 to vector<16x128xi32>
      %104 = arith.andi %102, %103 : vector<16x128xi32>
      %105 = arith.addi %86, %104 : vector<16x128xi32>
      %c16_i32_26 = arith.constant 16 : i32
      %106 = vector.broadcast %c16_i32_26 : i32 to vector<16x128xi32>
      %107 = arith.shrui %102, %106 : vector<16x128xi32>
      %108 = arith.addi %105, %107 : vector<16x128xi32>
      %c320440878_i32 = arith.constant 320440878 : i32
      %109 = arith.addi %63, %c320440878_i32 : i32
      %110 = vector.broadcast %109 : i32 to vector<16x128xi32>
      %111 = arith.xori %58, %110 : vector<16x128xi32>
      %c16_i32_27 = arith.constant 16 : i32
      %112 = vector.broadcast %c16_i32_27 : i32 to vector<16x128xi32>
      %113 = arith.shrui %111, %112 : vector<16x128xi32>
      %114 = arith.xori %111, %113 : vector<16x128xi32>
      %c2146121005_i32_28 = arith.constant 2146121005 : i32
      %115 = vector.broadcast %c2146121005_i32_28 : i32 to vector<16x128xi32>
      %116 = arith.muli %114, %115 : vector<16x128xi32>
      %c15_i32_29 = arith.constant 15 : i32
      %117 = vector.broadcast %c15_i32_29 : i32 to vector<16x128xi32>
      %118 = arith.shrui %116, %117 : vector<16x128xi32>
      %119 = arith.xori %116, %118 : vector<16x128xi32>
      %c-2073254261_i32_30 = arith.constant -2073254261 : i32
      %120 = vector.broadcast %c-2073254261_i32_30 : i32 to vector<16x128xi32>
      %121 = arith.muli %119, %120 : vector<16x128xi32>
      %c16_i32_31 = arith.constant 16 : i32
      %122 = vector.broadcast %c16_i32_31 : i32 to vector<16x128xi32>
      %123 = arith.shrui %121, %122 : vector<16x128xi32>
      %124 = arith.xori %121, %123 : vector<16x128xi32>
      %c65535_i32_32 = arith.constant 65535 : i32
      %125 = vector.broadcast %c65535_i32_32 : i32 to vector<16x128xi32>
      %126 = arith.andi %124, %125 : vector<16x128xi32>
      %127 = arith.addi %108, %126 : vector<16x128xi32>
      %c16_i32_33 = arith.constant 16 : i32
      %128 = vector.broadcast %c16_i32_33 : i32 to vector<16x128xi32>
      %129 = arith.shrui %124, %128 : vector<16x128xi32>
      %130 = arith.addi %127, %129 : vector<16x128xi32>
      %c57701188_i32 = arith.constant 57701188 : i32
      %131 = arith.addi %63, %c57701188_i32 : i32
      %132 = vector.broadcast %131 : i32 to vector<16x128xi32>
      %133 = arith.xori %58, %132 : vector<16x128xi32>
      %c16_i32_34 = arith.constant 16 : i32
      %134 = vector.broadcast %c16_i32_34 : i32 to vector<16x128xi32>
      %135 = arith.shrui %133, %134 : vector<16x128xi32>
      %136 = arith.xori %133, %135 : vector<16x128xi32>
      %c2146121005_i32_35 = arith.constant 2146121005 : i32
      %137 = vector.broadcast %c2146121005_i32_35 : i32 to vector<16x128xi32>
      %138 = arith.muli %136, %137 : vector<16x128xi32>
      %c15_i32_36 = arith.constant 15 : i32
      %139 = vector.broadcast %c15_i32_36 : i32 to vector<16x128xi32>
      %140 = arith.shrui %138, %139 : vector<16x128xi32>
      %141 = arith.xori %138, %140 : vector<16x128xi32>
      %c-2073254261_i32_37 = arith.constant -2073254261 : i32
      %142 = vector.broadcast %c-2073254261_i32_37 : i32 to vector<16x128xi32>
      %143 = arith.muli %141, %142 : vector<16x128xi32>
      %c16_i32_38 = arith.constant 16 : i32
      %144 = vector.broadcast %c16_i32_38 : i32 to vector<16x128xi32>
      %145 = arith.shrui %143, %144 : vector<16x128xi32>
      %146 = arith.xori %143, %145 : vector<16x128xi32>
      %c65535_i32_39 = arith.constant 65535 : i32
      %147 = vector.broadcast %c65535_i32_39 : i32 to vector<16x128xi32>
      %148 = arith.andi %146, %147 : vector<16x128xi32>
      %149 = arith.addi %130, %148 : vector<16x128xi32>
      %c16_i32_40 = arith.constant 16 : i32
      %150 = vector.broadcast %c16_i32_40 : i32 to vector<16x128xi32>
      %151 = arith.shrui %146, %150 : vector<16x128xi32>
      %152 = arith.addi %149, %151 : vector<16x128xi32>
      %c-1542899678_i32 = arith.constant -1542899678 : i32
      %153 = arith.addi %63, %c-1542899678_i32 : i32
      %154 = vector.broadcast %153 : i32 to vector<16x128xi32>
      %155 = arith.xori %58, %154 : vector<16x128xi32>
      %c16_i32_41 = arith.constant 16 : i32
      %156 = vector.broadcast %c16_i32_41 : i32 to vector<16x128xi32>
      %157 = arith.shrui %155, %156 : vector<16x128xi32>
      %158 = arith.xori %155, %157 : vector<16x128xi32>
      %c2146121005_i32_42 = arith.constant 2146121005 : i32
      %159 = vector.broadcast %c2146121005_i32_42 : i32 to vector<16x128xi32>
      %160 = arith.muli %158, %159 : vector<16x128xi32>
      %c15_i32_43 = arith.constant 15 : i32
      %161 = vector.broadcast %c15_i32_43 : i32 to vector<16x128xi32>
      %162 = arith.shrui %160, %161 : vector<16x128xi32>
      %163 = arith.xori %160, %162 : vector<16x128xi32>
      %c-2073254261_i32_44 = arith.constant -2073254261 : i32
      %164 = vector.broadcast %c-2073254261_i32_44 : i32 to vector<16x128xi32>
      %165 = arith.muli %163, %164 : vector<16x128xi32>
      %c16_i32_45 = arith.constant 16 : i32
      %166 = vector.broadcast %c16_i32_45 : i32 to vector<16x128xi32>
      %167 = arith.shrui %165, %166 : vector<16x128xi32>
      %168 = arith.xori %165, %167 : vector<16x128xi32>
      %c65535_i32_46 = arith.constant 65535 : i32
      %169 = vector.broadcast %c65535_i32_46 : i32 to vector<16x128xi32>
      %170 = arith.andi %168, %169 : vector<16x128xi32>
      %171 = arith.addi %152, %170 : vector<16x128xi32>
      %c16_i32_47 = arith.constant 16 : i32
      %172 = vector.broadcast %c16_i32_47 : i32 to vector<16x128xi32>
      %173 = arith.shrui %168, %172 : vector<16x128xi32>
      %174 = arith.addi %171, %173 : vector<16x128xi32>
      %c698298832_i32 = arith.constant 698298832 : i32
      %175 = arith.addi %63, %c698298832_i32 : i32
      %176 = vector.broadcast %175 : i32 to vector<16x128xi32>
      %177 = arith.xori %58, %176 : vector<16x128xi32>
      %c16_i32_48 = arith.constant 16 : i32
      %178 = vector.broadcast %c16_i32_48 : i32 to vector<16x128xi32>
      %179 = arith.shrui %177, %178 : vector<16x128xi32>
      %180 = arith.xori %177, %179 : vector<16x128xi32>
      %c2146121005_i32_49 = arith.constant 2146121005 : i32
      %181 = vector.broadcast %c2146121005_i32_49 : i32 to vector<16x128xi32>
      %182 = arith.muli %180, %181 : vector<16x128xi32>
      %c15_i32_50 = arith.constant 15 : i32
      %183 = vector.broadcast %c15_i32_50 : i32 to vector<16x128xi32>
      %184 = arith.shrui %182, %183 : vector<16x128xi32>
      %185 = arith.xori %182, %184 : vector<16x128xi32>
      %c-2073254261_i32_51 = arith.constant -2073254261 : i32
      %186 = vector.broadcast %c-2073254261_i32_51 : i32 to vector<16x128xi32>
      %187 = arith.muli %185, %186 : vector<16x128xi32>
      %c16_i32_52 = arith.constant 16 : i32
      %188 = vector.broadcast %c16_i32_52 : i32 to vector<16x128xi32>
      %189 = arith.shrui %187, %188 : vector<16x128xi32>
      %190 = arith.xori %187, %189 : vector<16x128xi32>
      %c65535_i32_53 = arith.constant 65535 : i32
      %191 = vector.broadcast %c65535_i32_53 : i32 to vector<16x128xi32>
      %192 = arith.andi %190, %191 : vector<16x128xi32>
      %193 = arith.addi %174, %192 : vector<16x128xi32>
      %c16_i32_54 = arith.constant 16 : i32
      %194 = vector.broadcast %c16_i32_54 : i32 to vector<16x128xi32>
      %195 = arith.shrui %190, %194 : vector<16x128xi32>
      %196 = arith.addi %193, %195 : vector<16x128xi32>
      %197 = arith.sitofp %196 : vector<16x128xi32> to vector<16x128xf32>
      %cst = arith.constant 1.52587891E-5 : f32
      %198 = vector.broadcast %cst : f32 to vector<16x128xf32>
      %199 = arith.mulf %197, %198 : vector<16x128xf32>
      %cst_55 = arith.constant 6.000000e+00 : f32
      %200 = vector.broadcast %cst_55 : f32 to vector<16x128xf32>
      %201 = arith.subf %199, %200 : vector<16x128xf32>
      %c0_56 = arith.constant 0 : index
      %c0_57 = arith.constant 0 : index
      %202 = vector.load %arg5[%c0_56, %c0_57] : memref<16x128xi8, #tpu.memory_space<vmem>>, vector<16x128xi8>
      %203 = arith.extui %202 : vector<16x128xi8> to vector<16x128xi32>
      %204 = arith.sitofp %203 : vector<16x128xi32> to vector<16x128xf32>
      %205 = vector.broadcast %36 : f32 to vector<16x128xf32>
      %206 = arith.mulf %205, %201 : vector<16x128xf32>
      %207 = arith.addf %204, %206 : vector<16x128xf32>
      %cst_58 = arith.constant 0.000000e+00 : f32
      %cst_59 = arith.constant 2.550000e+02 : f32
      %208 = vector.broadcast %cst_58 : f32 to vector<16x128xf32>
      %209 = arith.maximumf %208, %207 : vector<16x128xf32>
      %210 = vector.broadcast %cst_59 : f32 to vector<16x128xf32>
      %211 = arith.minimumf %210, %209 : vector<16x128xf32>
      %212 = arith.fptosi %211 : vector<16x128xf32> to vector<16x128xi32>
      %213 = vector.broadcast %6 : i32 to vector<16x128xi32>
      %214 = arith.cmpi sge, %39, %213 : vector<16x128xi32>
      %215 = vector.broadcast %10 : i32 to vector<16x128xi32>
      %216 = arith.cmpi slt, %39, %215 : vector<16x128xi32>
      %217 = arith.andi %214, %216 : vector<16x128xi1>
      %218 = vector.broadcast %14 : i32 to vector<16x128xi32>
      %219 = arith.cmpi sge, %42, %218 : vector<16x128xi32>
      %220 = arith.andi %217, %219 : vector<16x128xi1>
      %221 = vector.broadcast %18 : i32 to vector<16x128xi32>
      %222 = arith.cmpi slt, %42, %221 : vector<16x128xi32>
      %223 = arith.andi %220, %222 : vector<16x128xi1>
      %c0_60 = arith.constant 0 : index
      %c0_61 = arith.constant 0 : index
      %224 = vector.load %arg6[%c0_60, %c0_61] : memref<16x128xi8, #tpu.memory_space<vmem>>, vector<16x128xi8>
      %225 = arith.extui %224 : vector<16x128xi8> to vector<16x128xi32>
      %226 = arith.select %223, %212, %225 : vector<16x128xi1>, vector<16x128xi32>
      %227 = arith.trunci %226 : vector<16x128xi32> to vector<16x128xi8>
      %c0_62 = arith.constant 0 : index
      %c0_63 = arith.constant 0 : index
      %228 = vector.load %arg6[%c0_62, %c0_63] : memref<16x128xi8, #tpu.memory_space<vmem>>, vector<16x128xi8>
      tpu.vector_store %arg6[%c0_62, %c0_63], %227 {strides = array<i32>} : memref<16x128xi8, #tpu.memory_space<vmem>>, vector<16x128xi8>,
    } else {
    }
    return
  }
  func.func @transform_0(%arg0: i32, %arg1: i32, %arg2: i32, %arg3: memref<10xi32, #tpu.memory_space<smem>>, %arg4: memref<1xi32, #tpu.memory_space<smem>>) -> (i32, i32) {
    %c0_i32 = arith.constant 0 : i32
    return %arg0, %arg1 : i32, i32
  }
  func.func @transform_1(%arg0: i32, %arg1: i32, %arg2: i32, %arg3: memref<10xi32, #tpu.memory_space<smem>>, %arg4: memref<1xi32, #tpu.memory_space<smem>>) -> (i32, i32) {
    %c0_i32 = arith.constant 0 : i32
    return %arg0, %arg1 : i32, i32
  }
}

</mosaic_0001>

<llo_original>
// kernel: tpu_custom_call.1
$region0: #{tpu_custom_call.1}
  #allocation0 [shape = 'u32[]', space=smem, size = 0x4, offset = 0x4, fixed_abs, tag = 'smem constant byte address 0x4 - core index']
  #allocation1 [shape = 'u32[144,128]{1,0:T(1,128)}', space=vmem, size = 0x12000, scoped, tag = 'internal scratch']
  #allocation2 [shape = 's32[1]{0}', space=sflag, size = 0x4, scoped, tag = 'scoped memory for tpu_custom_call.1']
  #allocation3 [shape = 'u8[512]{0}', space=smem, size = 0x200, scoped, tag = 'prefetched SMEM operand 0']
  #allocation4 [shape = 's32[1]{0:T(128)S(6)}', space=smem, size = 0x200, scoped, tag = 'prefetched SMEM operand 1']
  %s0 = inlined_call_operand.vmem [shape: s32[10], index: 0, kind: input, shape index: {}]
  %s1 = inlined_call_operand.<no memory space> [shape: s32[1], index: 1, kind: input, shape index: {}]
  %s2 = inlined_call_operand.hbm [shape: u8[16,128], index: 2, kind: input, shape index: {}]
  %s3 = inlined_call_operand.hbm [shape: u8[16,128], index: 3, kind: output, shape index: {}]
  %s4 = sld [smem:[#allocation0]]
  $region49: #{tpu_custom_call.1} parent=0
    _
  %s6 = ssub.s32 1, %s4
  %s7 = scalar_select 0, %s6, %s4
  %s8 = sshll.u32 %s0, 4
  %s9 = int_to_ptr.vmem [resolvable:$true] %s8
  %11 = dma.vmem_to_smem %s9, 16, [#allocation3], [#allocation2]
  %12 = sst [smem:[#allocation4]] %s1
  %13 = dma.done [#allocation2], 16
  %14 = sfence
  $region1: #{tpu_custom_call.1} parent=0
    #allocation5 [shape = 'u8[2048]{0}', space=vmem, size = 0x800, scoped, tag = 'input window, operand 2, single buffered']
    #allocation6 [shape = 's32[2]{0}', space=sflag, size = 0x8, scoped, tag = 'scoped memory for tpu_custom_call.1']
    #allocation7 [shape = 's32[2]{0}', space=sflag, size = 0x8, scoped, tag = 'scoped memory for tpu_custom_call.1']
    #allocation8 [shape = 'u8[2048]{0}', space=vmem, size = 0x800, scoped, tag = 'output window, operand 0, single buffered']
    %15 = vsyncpa [#allocation6], 0
    %16 = vsyncpa [#allocation7], 0
    loop: start=0, step=1, limit=4
    $region2: #{tpu_custom_call.1} parent=1 // loop_pre_header
      _
    $region3: #{tpu_custom_call.1} parent=1 // loop_header
      %s18 = sphi 0, %s22
      %p19 = scmp.ge.s32.totalorder %s18, 4
      %s25 = sphi 0, %s44
      %s26 = sphi 0, %s40
      %s27 = sphi 0, %s36
      %s28 = sphi 0, %s25
      %s29 = sphi 0, %s26
      %s30 = sphi 0, %s27
      %s31 = sphi 0, %s28
      %s32 = sphi 0, %s29
      %s33 = sphi 0, %s30
      %s49 = sphi 0, %s51
      %s52 = sphi 0, %s49
      %s53 = sphi 0, %s52
      %s69 = sphi 0, %s53
      %s77 = sphi 0, %s79
      %s80 = sphi 0, %s77
      %s81 = sphi 0, %s80
      %s97 = sphi 0, %s81
    $region4: #{tpu_custom_call.1} parent=1 // loop_header_branch
      %21 = sbr.rel (%p19) target = $region8
    $region5: #{tpu_custom_call.1} parent=1 // loop_body
      %s23 = ssub.s32 %s18, 1
      %s24 = ssub.s32 %s18, 2
      %s34 = sadd.s32 1, %s27
      %p35 = scmp.ge.s32.totalorder %s34, 2
      %s36 = scalar_select %p35, 0, %s34
      %s37 = sadd.s32 1, %s26
      %s38 = scalar_select %p35, %s37, %s26
      %p39 = scmp.ge.s32.totalorder %s38, 1
      %s40 = scalar_select %p39, 0, %s38
      %s41 = sadd.s32 1, %s25
      %s42 = scalar_select %p39, %s41, %s25
      %p43 = scmp.ge.s32.totalorder %s42, 1
      %s44 = scalar_select %p43, 0, %s42
      %s45 = ssub.s32 %s25, %s44
      %s46 = ssub.s32 %s26, %s40
      %s47 = sor.u32 %s45, %s46
      %p48 = scmp.eq.s32.totalorder %s47, 0
      %s50 = sadd.s32 %s49, 1
      %s51 = scalar_select %p48, %s49, %s50
      %p54 = pneg %p48
      %p55 = scmp.eq.s32.totalorder %s18, 1
      %p56 = por %p54, %p55
      %p57 = scmp.ne.s32.totalorder %s49, %s52
      %p58 = scmp.eq.s32.totalorder %s18, 0
      %p59 = por %p57, %p58
      %p60 = scmp.ne.s32.totalorder %s49, %s52
      %p61 = scmp.eq.s32.totalorder %s23, 1
      %p62 = por %p60, %p61
      %p63 = scmp.ne.s32.totalorder %s52, %s53
      %p64 = scmp.eq.s32.totalorder %s23, 0
      %p65 = por %p63, %p64
      %p66 = scmp.ne.s32.totalorder %s52, %s53
      %p67 = scmp.eq.s32.totalorder %s24, 1
      %p68 = por %p66, %p67
      %p70 = scmp.ne.s32.totalorder %s53, %s69
      %p71 = scmp.eq.s32.totalorder %s24, 0
      %p72 = por %p70, %p71
      %s73 = ssub.s32 %s25, %s44
      %s74 = ssub.s32 %s26, %s40
      %s75 = sor.u32 %s73, %s74
      %p76 = scmp.eq.s32.totalorder %s75, 0
      %s78 = sadd.s32 %s77, 1
      %s79 = scalar_select %p76, %s77, %s78
      %p82 = pneg %p76
      %p83 = scmp.eq.s32.totalorder %s18, 1
      %p84 = por %p82, %p83
      %p85 = scmp.ne.s32.totalorder %s77, %s80
      %p86 = scmp.eq.s32.totalorder %s18, 0
      %p87 = por %p85, %p86
      %p88 = scmp.ne.s32.totalorder %s77, %s80
      %p89 = scmp.eq.s32.totalorder %s23, 1
      %p90 = por %p88, %p89
      %p91 = scmp.ne.s32.totalorder %s80, %s81
      %p92 = scmp.eq.s32.totalorder %s23, 0
      %p93 = por %p91, %p92
      %p94 = scmp.ne.s32.totalorder %s80, %s81
      %p95 = scmp.eq.s32.totalorder %s24, 1
      %p96 = por %p94, %p95
      %p98 = scmp.ne.s32.totalorder %s81, %s97
      %p99 = scmp.eq.s32.totalorder %s24, 0
      %p100 = por %p98, %p99
      %p101 = scmp.le.s32.totalorder 1, %s18
      %p102 = scmp.lt.s32.totalorder %s18, 3
      %p103 = pnand %p101, %p102
      %p104 = pneg %p103
      // Predicated region
      $region9: #{tpu_custom_call.1} parent=5 // pred_check
        _
      $region10: #{tpu_custom_call.1} parent=5 // pred_check_branch
        %106 = sbr.rel (%p103) target = $region12
      $region11: #{tpu_custom_call.1} parent=5 // pred_region
        %s107 = ssub.s32 %s18, 1
        // Predicated region
        $region13: #{tpu_custom_call.1} parent=11 // pred_check
          %p108 = pneg %p65
        $region14: #{tpu_custom_call.1} parent=11 // pred_check_branch
          %110 = sbr.rel (%p108) target = $region16
        $region15: #{tpu_custom_call.1} parent=11 // pred_region
          %s111 = smul.u32 2, %s28
          %s113 = ssub.s32 64, 64
          %114 = vsyncadd [#allocation6], %s113
          %s115 = sadd.s32 %s29, %s111
          %s116 = smul.addr %s115, 32
          %s117 = scalar_lea.hbm %s2, %s116
          %s118 = sshll.u32 [#allocation5], 4
          %s119 = int_to_ptr.vmem [resolvable:$true] %s118
          %124 = dma.hbm_to_vmem [thread:$0]  %s117, 64, %s119, [#allocation6], 32, 32, 2
        $region16: #{tpu_custom_call.1} parent=11 // pred_fallthru
          _
      $region12: #{tpu_custom_call.1} parent=5 // pred_fallthru
        _
      %p125 = scmp.lt.s32.totalorder %s18, 2
      // Predicated region
      $region17: #{tpu_custom_call.1} parent=5 // pred_check
        %p126 = pneg %p125
      $region18: #{tpu_custom_call.1} parent=5 // pred_check_branch
        %128 = sbr.rel (%p126) target = $region20
      $region19: #{tpu_custom_call.1} parent=5 // pred_region
        _
      $region20: #{tpu_custom_call.1} parent=5 // pred_fallthru
        _
      %p129 = scmp.le.s32.totalorder 1, %s18
      %p130 = scmp.lt.s32.totalorder %s18, 3
      %p131 = pnand %p129, %p130
      %p132 = pneg %p131
      // Predicated region
      $region21: #{tpu_custom_call.1} parent=5 // pred_check
        _
      $region22: #{tpu_custom_call.1} parent=5 // pred_check_branch
        %134 = sbr.rel (%p131) target = $region24
      $region23: #{tpu_custom_call.1} parent=5 // pred_region
        %s135 = ssub.s32 %s18, 1
        // Predicated region
        $region25: #{tpu_custom_call.1} parent=23 // pred_check
          %p136 = pneg %p65
        $region26: #{tpu_custom_call.1} parent=23 // pred_check_branch
          %138 = sbr.rel (%p136) target = $region28
        $region27: #{tpu_custom_call.1} parent=23 // pred_region
          %139 = dma.done [#allocation6], 64
        $region28: #{tpu_custom_call.1} parent=23 // pred_fallthru
          _
        %p140 = pneg %p65
        %p141 = pneg %p62
        %p142 = pneg %p93
        %p143 = pneg %p90
        %s144 = smul.u32 2, %s28
        %s145 = smul.u32 2, %s28
        %p146 = scmp.eq.s32.totalorder %s30, 0
        // Predicated region
        $region29: #{tpu_custom_call.1} parent=23 // pred_check
          %p147 = pneg %p146
        $region30: #{tpu_custom_call.1} parent=23 // pred_check_branch
          %149 = sbr.rel (%p147) target = $region32
        $region31: #{tpu_custom_call.1} parent=23 // pred_region
          %v150 = vld [vmem:[#allocation5] sm:$0x3]
          %v151 = vld [vmem:[#allocation5 + $0x2] sm:$0x3]
          %152 = vst [vmem:[#allocation8] sm:$0x3] %v150
          %153 = vst [vmem:[#allocation8 + $0x2] sm:$0x3] %v151
        $region32: #{tpu_custom_call.1} parent=23 // pred_fallthru
          _
        %s154 = smul.u32 %s30, 5
        %s155 = sld [smem:[#allocation3 + %s154]]
        %s156 = sadd.s32 %s154, 1
        %s157 = sld [smem:[#allocation3 + %s156]]
        %s158 = sadd.s32 %s154, 2
        %s159 = sld [smem:[#allocation3 + %s158]]
        %s160 = sadd.s32 %s154, 3
        %s161 = sld [smem:[#allocation3 + %s160]]
        %s162 = smul.u32 %s28, 16
        %s163 = smul.u32 %s29, 128
        %s164 = sadd.s32 %s162, 16
        %p165 = scmp.lt.s32.totalorder %s155, %s164
        %p166 = scmp.gt.s32.totalorder %s157, %s162
        %p167 = pnand %p165, %p166
        %p168 = pneg %p167
        %s169 = sadd.s32 %s163, 128
        %p170 = scmp.lt.s32.totalorder %s159, %s169
        %p171 = scmp.gt.s32.totalorder %s161, %s163
        %p172 = pnand %p170, %p171
        %p173 = pneg %p172
        %p174 = pnand %p168, %p173
        %p175 = pneg %p174
        // Predicated region
        $region33: #{tpu_custom_call.1} parent=23 // pred_check
          _
        $region34: #{tpu_custom_call.1} parent=23 // pred_check_branch
          %177 = sbr.rel (%p174) target = $region36
        $region35: #{tpu_custom_call.1} parent=23 // pred_region
          %s178 = sadd.s32 %s154, 4
          %s179 = sld [smem:[#allocation3 + %s178]]
          %s180 = scvt.s32.f32 %s179
          %v181 = vlaneseq
          %v182 = vshrl.u32 %v181, 7
          %v183 = vadd.s32 %v182, 8
          %v184 = vstv %s162
          %v185 = vadd.s32 %v182, %v184
          %v186 = vadd.s32 %v183, %v184
          %v187 = vlaneseq
          %v188 = vand.u32 %v187, 127
          %v189 = vstv %s163
          %v190 = vadd.s32 %v188, %v189
          %v191 = vmul.u32 %v185, 128
          %v192 = vmul.u32 %v186, 128
          %v193 = vadd.s32 %v191, %v190
          %v194 = vadd.s32 %v192, %v190
          %v195 = vshrl.u32 %v193, 16
          %v196 = vshrl.u32 %v194, 16
          %v197 = vxor.u32 %v193, %v195
          %v198 = vxor.u32 %v194, %v196
          %v199 = vmul.u32 %v197, 2146121005
          %v200 = vmul.u32 %v198, 2146121005
          %v201 = vshrl.u32 %v199, 15
          %v202 = vshrl.u32 %v200, 15
          %v203 = vxor.u32 %v199, %v201
          %v204 = vxor.u32 %v200, %v202
          %v205 = vmul.u32 %v203, 2221713035
          %v206 = vmul.u32 %v204, 2221713035
          %v207 = vshrl.u32 %v205, 16
          %v208 = vshrl.u32 %v206, 16
          %v209 = vxor.u32 %v205, %v207
          %v210 = vxor.u32 %v206, %v208
          %s211 = sld [smem:[#allocation4]]
          %s212 = smul.u32 %s211, 2654435761
          %s213 = sadd.s32 %s30, 1
          %s214 = smul.u32 %s213, 2246822519
          %s215 = sadd.s32 %s212, %s214
          %s216 = sadd.s32 %s215, 608135816
          %v217 = vstv %s216
          %v218 = vxor.u32 %v209, %v217
          %v219 = vxor.u32 %v210, %v217
          %v220 = vshrl.u32 %v218, 16
          %v221 = vshrl.u32 %v219, 16
          %v222 = vxor.u32 %v218, %v220
          %v223 = vxor.u32 %v219, %v221
          %v224 = vmul.u32 %v222, 2146121005
          %v225 = vmul.u32 %v223, 2146121005
          %v226 = vshrl.u32 %v224, 15
          %v227 = vshrl.u32 %v225, 15
          %v228 = vxor.u32 %v224, %v226
          %v229 = vxor.u32 %v225, %v227
          %v230 = vmul.u32 %v228, 2221713035
          %v231 = vmul.u32 %v229, 2221713035
          %v232 = vshrl.u32 %v230, 16
          %v233 = vshrl.u32 %v231, 16
          %v234 = vxor.u32 %v230, %v232
          %v235 = vxor.u32 %v231, %v233
          %v236 = vand.u32 %v234, 65535
          %v237 = vand.u32 %v235, 65535
          %v238 = vshrl.u32 %v234, 16
          %v239 = vshrl.u32 %v235, 16
          %v240 = vadd.s32 %v236, %v238
          %v241 = vadd.s32 %v237, %v239
          %s242 = sadd.s32 %s215, 2242054355
          %v243 = vstv %s242
          %v244 = vxor.u32 %v209, %v243
          %v245 = vxor.u32 %v210, %v243
          %v246 = vshrl.u32 %v244, 16
          %v247 = vshrl.u32 %v245, 16
          %v248 = vxor.u32 %v244, %v246
          %v249 = vxor.u32 %v245, %v247
          %v250 = vmul.u32 %v248, 2146121005
          %v251 = vmul.u32 %v249, 2146121005
          %v252 = vshrl.u32 %v250, 15
          %v253 = vshrl.u32 %v251, 15
          %v254 = vxor.u32 %v250, %v252
          %v255 = vxor.u32 %v251, %v253
          %v256 = vmul.u32 %v254, 2221713035
          %v257 = vmul.u32 %v255, 2221713035
          %v258 = vshrl.u32 %v256, 16
          %v259 = vshrl.u32 %v257, 16
          %v260 = vxor.u32 %v256, %v258
          %v261 = vxor.u32 %v257, %v259
          %v262 = vand.u32 %v260, 65535
          %v263 = vand.u32 %v261, 65535
          %v264 = vadd.s32 %v240, %v262
          %v265 = vadd.s32 %v241, %v263
          %v266 = vshrl.u32 %v260, 16
          %v267 = vshrl.u32 %v261, 16
          %v268 = vadd.s32 %v264, %v266
          %v269 = vadd.s32 %v265, %v267
          %s270 = sadd.s32 %s215, 320440878
          %v271 = vstv %s270
          %v272 = vxor.u32 %v209, %v271
          %v273 = vxor.u32 %v210, %v271
          %v274 = vshrl.u32 %v272, 16
          %v275 = vshrl.u32 %v273, 16
          %v276 = vxor.u32 %v272, %v274
          %v277 = vxor.u32 %v273, %v275
          %v278 = vmul.u32 %v276, 2146121005
          %v279 = vmul.u32 %v277, 2146121005
          %v280 = vshrl.u32 %v278, 15
          %v281 = vshrl.u32 %v279, 15
          %v282 = vxor.u32 %v278, %v280
          %v283 = vxor.u32 %v279, %v281
          %v284 = vmul.u32 %v282, 2221713035
          %v285 = vmul.u32 %v283, 2221713035
          %v286 = vshrl.u32 %v284, 16
          %v287 = vshrl.u32 %v285, 16
          %v288 = vxor.u32 %v284, %v286
          %v289 = vxor.u32 %v285, %v287
          %v290 = vand.u32 %v288, 65535
          %v291 = vand.u32 %v289, 65535
          %v292 = vadd.s32 %v268, %v290
          %v293 = vadd.s32 %v269, %v291
          %v294 = vshrl.u32 %v288, 16
          %v295 = vshrl.u32 %v289, 16
          %v296 = vadd.s32 %v292, %v294
          %v297 = vadd.s32 %v293, %v295
          %s298 = sadd.s32 %s215, 57701188
          %v299 = vstv %s298
          %v300 = vxor.u32 %v209, %v299
          %v301 = vxor.u32 %v210, %v299
          %v302 = vshrl.u32 %v300, 16
          %v303 = vshrl.u32 %v301, 16
          %v304 = vxor.u32 %v300, %v302
          %v305 = vxor.u32 %v301, %v303
          %v306 = vmul.u32 %v304, 2146121005
          %v307 = vmul.u32 %v305, 2146121005
          %v308 = vshrl.u32 %v306, 15
          %v309 = vshrl.u32 %v307, 15
          %v310 = vxor.u32 %v306, %v308
          %v311 = vxor.u32 %v307, %v309
          %v312 = vmul.u32 %v310, 2221713035
          %v313 = vmul.u32 %v311, 2221713035
          %v314 = vshrl.u32 %v312, 16
          %v315 = vshrl.u32 %v313, 16
          %v316 = vxor.u32 %v312, %v314
          %v317 = vxor.u32 %v313, %v315
          %v318 = vand.u32 %v316, 65535
          %v319 = vand.u32 %v317, 65535
          %v320 = vadd.s32 %v296, %v318
          %v321 = vadd.s32 %v297, %v319
          %v322 = vshrl.u32 %v316, 16
          %v323 = vshrl.u32 %v317, 16
          %v324 = vadd.s32 %v320, %v322
          %v325 = vadd.s32 %v321, %v323
          %s326 = sadd.s32 %s215, 2752067618
          %v327 = vstv %s326
          %v328 = vxor.u32 %v209, %v327
          %v329 = vxor.u32 %v210, %v327
          %v330 = vshrl.u32 %v328, 16
          %v331 = vshrl.u32 %v329, 16
          %v332 = vxor.u32 %v328, %v330
          %v333 = vxor.u32 %v329, %v331
          %v334 = vmul.u32 %v332, 2146121005
          %v335 = vmul.u32 %v333, 2146121005
          %v336 = vshrl.u32 %v334, 15
          %v337 = vshrl.u32 %v335, 15
          %v338 = vxor.u32 %v334, %v336
          %v339 = vxor.u32 %v335, %v337
          %v340 = vmul.u32 %v338, 2221713035
          %v341 = vmul.u32 %v339, 2221713035
          %v342 = vshrl.u32 %v340, 16
          %v343 = vshrl.u32 %v341, 16
          %v344 = vxor.u32 %v340, %v342
          %v345 = vxor.u32 %v341, %v343
          %v346 = vand.u32 %v344, 65535
          %v347 = vand.u32 %v345, 65535
          %v348 = vadd.s32 %v324, %v346
          %v349 = vadd.s32 %v325, %v347
          %v350 = vshrl.u32 %v344, 16
          %v351 = vshrl.u32 %v345, 16
          %v352 = vadd.s32 %v348, %v350
          %v353 = vadd.s32 %v349, %v351
          %s354 = sadd.s32 %s215, 698298832
          %v355 = vstv %s354
          %v356 = vxor.u32 %v209, %v355
          %v357 = vxor.u32 %v210, %v355
          %v358 = vshrl.u32 %v356, 16
          %v359 = vshrl.u32 %v357, 16
          %v360 = vxor.u32 %v356, %v358
          %v361 = vxor.u32 %v357, %v359
          %v362 = vmul.u32 %v360, 2146121005
          %v363 = vmul.u32 %v361, 2146121005
          %v364 = vshrl.u32 %v362, 15
          %v365 = vshrl.u32 %v363, 15
          %v366 = vxor.u32 %v362, %v364
          %v367 = vxor.u32 %v363, %v365
          %v368 = vmul.u32 %v366, 2221713035
          %v369 = vmul.u32 %v367, 2221713035
          %v370 = vshrl.u32 %v368, 16
          %v371 = vshrl.u32 %v369, 16
          %v372 = vxor.u32 %v368, %v370
          %v373 = vxor.u32 %v369, %v371
          %v374 = vand.u32 %v372, 65535
          %v375 = vand.u32 %v373, 65535
          %v376 = vadd.s32 %v352, %v374
          %v377 = vadd.s32 %v353, %v375
          %v378 = vshrl.u32 %v372, 16
          %v379 = vshrl.u32 %v373, 16
          %v380 = vadd.s32 %v376, %v378
          %v381 = vadd.s32 %v377, %v379
          %v382 = vcvt.s32.f32 %v380
          %v383 = vcvt.s32.f32 %v381
          %v384 = vmul.f32 %v382, 1.5258789e-05
          %v385 = vmul.f32 %v383, 1.5258789e-05
          %v386 = vsub.f32 %v384, 6.0
          %v387 = vsub.f32 %v385, 6.0
          %v388 = vld [vmem:[#allocation5] sm:$0x3]
          %v389 = vld [vmem:[#allocation5 + $0x2] sm:$0x3]
          %v390 = vunpack.c.0.s8 %v388
          %v391 = vunpack.c.0.s8 %v389
          %v392 = vand.u32 %v390, 255
          %v393 = vand.u32 %v391, 255
          %v394 = vcvt.s32.f32 %v392
          %v395 = vcvt.s32.f32 %v393
          %v396 = vstv %s180
          %v397 = vmul.f32 %v396, %v386
          %v398 = vmul.f32 %v396, %v387
          %v399 = vadd.f32 %v394, %v397
          %v400 = vadd.f32 %v395, %v398
          %v401 = vmax.f32 %v399, 0.0
          %v402 = vmax.f32 %v400, 0.0
          %v403 = vmin.f32 %v401, 255.0
          %v404 = vmin.f32 %v402, 255.0
          %v405 = vcvt.f32.s32.to.zero.pseudo %v403
          %v406 = vcvt.f32.s32.to.zero.pseudo %v404
          %v407 = vstv %s155
          %vm408 = vcmp.ge.s32.totalorder %v185, %v407
          %vm409 = vcmp.ge.s32.totalorder %v186, %v407
          %v410 = vstv %s157
          %vm411 = vcmp.lt.s32.totalorder %v185, %v410
          %vm412 = vcmp.lt.s32.totalorder %v186, %v410
          %vm413 = vmand %vm408, %vm411
          %vm414 = vmand %vm409, %vm412
          %v415 = vstv %s159
          %vm416 = vcmp.ge.s32.totalorder %v190, %v415
          %vm417 = vmand %vm413, %vm416
          %vm418 = vmand %vm414, %vm416
          %v419 = vstv %s161
          %vm420 = vcmp.lt.s32.totalorder %v190, %v419
          %vm421 = vmand %vm417, %vm420
          %vm422 = vmand %vm418, %vm420
          %v423 = vld [vmem:[#allocation8] sm:$0x3]
          %v424 = vld [vmem:[#allocation8 + $0x2] sm:$0x3]
          %v425 = vunpack.c.0.s8 %v423
          %v426 = vunpack.c.0.s8 %v424
          %v427 = vand.u32 %v425, 255
          %v428 = vand.u32 %v426, 255
          %v429 = vsel %vm421, %v405, %v427
          %v430 = vsel %vm422, %v406, %v428
          %v431 = vpack.c.b16 %v429, %v429
          %v432 = vpack.c.b8 %v431, %v431
          %v433 = vpack.c.b16 %v430, %v430
          %v434 = vpack.c.b8 %v433, %v433
          %435 = vst [vmem:[#allocation8] sm:$0x3] %v432
          %436 = vst [vmem:[#allocation8 + $0x2] sm:$0x3] %v434
        $region36: #{tpu_custom_call.1} parent=23 // pred_fallthru
          _
        // Predicated region
        $region37: #{tpu_custom_call.1} parent=23 // pred_check
          %p437 = pneg %p90
        $region38: #{tpu_custom_call.1} parent=23 // pred_check_branch
          %439 = sbr.rel (%p437) target = $region40
        $region39: #{tpu_custom_call.1} parent=23 // pred_region
          %s440 = smul.u32 2, %s28
          %s442 = ssub.s32 64, 64
          %443 = vsyncadd [#allocation7], %s442
          %s444 = sadd.s32 %s29, %s440
          %s445 = smul.addr %s444, 32
          %s446 = scalar_lea.hbm %s3, %s445
          %s447 = sshll.u32 [#allocation8], 4
          %s448 = int_to_ptr.vmem [resolvable:$true] %s447
          %453 = dma.vmem_to_hbm [thread:$0]  %s448, 64, %s446, [#allocation7], 32, 32, 2
        $region40: #{tpu_custom_call.1} parent=23 // pred_fallthru
          _
        // Predicated region
        $region41: #{tpu_custom_call.1} parent=23 // pred_check
          %p454 = pneg %p90
        $region42: #{tpu_custom_call.1} parent=23 // pred_check_branch
          %456 = sbr.rel (%p454) target = $region44
        $region43: #{tpu_custom_call.1} parent=23 // pred_region
          %457 = dma.done [#allocation7], 64
        $region44: #{tpu_custom_call.1} parent=23 // pred_fallthru
          _
      $region24: #{tpu_custom_call.1} parent=5 // pred_fallthru
        _
      %p458 = scmp.le.s32.totalorder 2, %s18
      // Predicated region
      $region45: #{tpu_custom_call.1} parent=5 // pred_check
        %p459 = pneg %p458
      $region46: #{tpu_custom_call.1} parent=5 // pred_check_branch
        %461 = sbr.rel (%p459) target = $region48
      $region47: #{tpu_custom_call.1} parent=5 // pred_region
        %s462 = ssub.s32 %s18, 2
      $region48: #{tpu_custom_call.1} parent=5 // pred_fallthru
        _
    $region6: #{tpu_custom_call.1} parent=1 // loop_footer
      %s22 = sadd.s32 1, %s18
    $region7: #{tpu_custom_call.1} parent=1 // loop_footer_branch
      %17 = sbr.rel target = $region3
    $region8: #{tpu_custom_call.1} parent=1 // loop_exit
      _
    %463 = vsyncpa [#allocation6], 1
    %s464 = scalar_lea.sflag [#allocation6], 1
    %465 = vsyncpa %s464, 1
    %466 = vsyncpa [#allocation7], 1
    %s467 = scalar_lea.sflag [#allocation7], 1
    %468 = vsyncpa %s467, 1

</llo_original>
